<compile_context>
chip_gen: v7x
topology: tpu7x:2x2x1
jax: 0.10.0
libtpu: 0.0.40
codegen_flags: <defaults>
</compile_context>

<pallas_src>
import functools

import jax
import jax.numpy as jnp
from jax.experimental import pallas as pl
from jax.experimental.pallas import tpu as pltpu

LANE = 128
SUBLANE = 8


def _round_up(n, m):
    return (n + m - 1) // m * m


def _pad2(a, rows, cols):
    r, c = a.shape
    return jnp.pad(a, ((0, rows - r), (0, cols - c)))


_PHYS_VMEM_BYTES = None


def _physical_vmem_bytes():
    """Physical VMEM of the local chip; conservative v7x floor if the query fails.

    Advisory only (feeds vmem_limit_bytes), so a broad fallback here cannot mask
    kernel errors.
    """
    global _PHYS_VMEM_BYTES
    if _PHYS_VMEM_BYTES is None:
        try:
            _PHYS_VMEM_BYTES = int(pltpu.get_tpu_info().vmem_capacity_bytes)
        except Exception:
            _PHYS_VMEM_BYTES = 64 * 2**20  # smallest per-TC VMEM (v7x)
    return _PHYS_VMEM_BYTES


def mlp_kernel(x_ref, w1_ref, b1_ref, w2_ref, b2_ref, w3_ref, b3_ref, o_ref):
    # Three matmuls + ReLUs fused; f32 accumulation on the MXU, operands in the
    # compute dtype (f32, or bf16 on v6e/v7x).  Biases stay f32.
    cdt = w1_ref.dtype
    x = x_ref[...].astype(cdt)
    h = jnp.dot(x, w1_ref[...], preferred_element_type=jnp.float32) + b1_ref[...]
    h = jnp.maximum(h, 0.0).astype(cdt)                  # .clamp(min=0)
    h = jnp.dot(h, w2_ref[...], preferred_element_type=jnp.float32) + b2_ref[...]
    h = jnp.maximum(h, 0.0).astype(cdt)                  # .clamp(min=0)
    out = jnp.dot(h, w3_ref[...], preferred_element_type=jnp.float32) + b3_ref[...]
    o_ref[...] = out.astype(o_ref.dtype)


@functools.partial(jax.jit, static_argnames=("batch_tile", "compute_dtype"))
def three_layer_network(x, params, *, batch_tile=1024, compute_dtype=jnp.float32):
    w1, b1, w2, b2, w3, b3 = params
    N, D_in = x.shape
    H1, H2, D_out = w1.shape[1], w2.shape[1], w3.shape[1]
    cdt = jnp.dtype(compute_dtype)

    # Lane-dense (128) padding of the *output* feature dims only; x keeps its
    # real D_in (BlockSpec last dim == full array dim is allowed).
    H1p = _round_up(H1, LANE)
    H2p = _round_up(H2, LANE)
    Dop = _round_up(D_out, LANE)

    # Batch tile: multiple of 8 sublanes; keep >= 2 grid steps whenever the
    # batch allows so ("parallel",) can shard across both v7x TensorCores.
    # Ragged last block via cdiv -- no wasted full tile when N % bt != 0.
    Nr = _round_up(N, SUBLANE)
    bt = min(_round_up(batch_tile, SUBLANE), Nr)
    if Nr >= 2 * SUBLANE:
        bt = min(bt, _round_up(pl.cdiv(Nr, 2), SUBLANE))
    grid = (pl.cdiv(N, bt),)

    # Tiny weight/bias pads run once per call under jit (not per grid step).
    w1p = _pad2(w1, D_in, H1p).astype(cdt)
    w2p = _pad2(w2, H1p, H2p).astype(cdt)
    w3p = _pad2(w3, H2p, Dop).astype(cdt)
    b1p = _pad2(b1, 1, H1p).astype(jnp.float32)
    b2p = _pad2(b2, 1, H2p).astype(jnp.float32)
    b3p = _pad2(b3, 1, Dop).astype(jnp.float32)

    # Advisory cost estimate from the *real* (unpadded) dims.
    flops = 2 * N * (D_in * H1 + H1 * H2 + H2 * D_out)
    real_bytes = (
        x.size * x.dtype.itemsize
        + sum(int(a.size) * a.dtype.itemsize for a in (w1, b1, w2, b2, w3, b3))
        + N * D_out * cdt.itemsize)
    cost = pl.CostEstimate(flops=int(flops), transcendentals=0,
                           bytes_accessed=int(real_bytes))

    # VMEM budget from the actual resident blocks (double-buffered x/out tiles
    # and weights + f32 intermediates), clamped to 0.75x physical VMEM.
    w_bytes = (D_in * H1p + H1p * H2p + H2p * Dop) * cdt.itemsize
    b_bytes = (H1p + H2p + Dop) * 4
    tile_bytes = bt * D_in * x.dtype.itemsize + bt * Dop * cdt.itemsize
    inter_bytes = bt * (H1p + H2p + Dop) * 4
    needed = 2 * (w_bytes + b_bytes + tile_bytes) + inter_bytes
    vmem_limit = int(min(_physical_vmem_bytes() * 3 // 4,
                         max(2 * needed, 8 * 2**20)))

    def wspec(shape):
        # Constant block across the grid: fetched once by the pipeline.
        return pl.BlockSpec(shape, lambda i: (0, 0))

    out_p = pl.pallas_call(
        mlp_kernel,
        out_shape=jax.ShapeDtypeStruct((N, Dop), cdt),
        grid=grid,
        in_specs=[
            pl.BlockSpec((bt, D_in), lambda i: (i, 0)),   # x: tiled over batch
            wspec((D_in, H1p)), wspec((1, H1p)),
            wspec((H1p, H2p)), wspec((1, H2p)),
            wspec((H2p, Dop)), wspec((1, Dop)),
        ],
        out_specs=pl.BlockSpec((bt, Dop), lambda i: (i, 0)),
        cost_estimate=cost,
        compiler_params=pltpu.CompilerParams(
            dimension_semantics=("parallel",),
            vmem_limit_bytes=vmem_limit,
        ),
    )(x, w1p, b1p, w2p, b2p, w3p, b3p)

    # Slice the real output columns and return f32 (fuses under jit).
    return out_p[:, :D_out].astype(jnp.float32)


def init_params(key, D_in, H1, H2, D_out):
    """Deterministic init matching torch.nn.Linear's U(-1/sqrt(fan_in), +1/sqrt(fan_in)).
    Weights are stored transposed vs PyTorch: (in_features, out_features)."""
    ks = jax.random.split(key, 6)

    def lin(kw, kb, fan_in, fan_out):
        bound = 1.0 / jnp.sqrt(jnp.float32(fan_in))
        w = jax.random.uniform(kw, (fan_in, fan_out), jnp.float32, -bound, bound)
        b = jax.random.uniform(kb, (1, fan_out), jnp.float32, -bound, bound)
        return w, b

    w1, b1 = lin(ks[0], ks[1], D_in, H1)
    w2, b2 = lin(ks[2], ks[3], H1, H2)
    w3, b3 = lin(ks[4], ks[5], H2, D_out)
    return (w1, b1, w2, b2, w3, b3)


if __name__ == "__main__":
    # Small shapes consistent with the module (H1 = H2 = 10).  N=512 gives
    # bt=256, grid=2, so pipelining / 2-TC grid sharding is exercised.
    N, D_in, H1, H2, D_out = 512, 16, 10, 10, 4

    key = jax.random.PRNGKey(0)
    kx, kp, kr = jax.random.split(key, 3)
    x = jax.random.normal(kx, (N, D_in), dtype=jnp.float32)
    params = init_params(kp, D_in, H1, H2, D_out)
    w1, b1, w2, b2, w3, b3 = params

    def reference(xv):
        r1 = jnp.maximum(xv @ w1 + b1, 0.0)
        r2 = jnp.maximum(r1 @ w2 + b2, 0.0)
        return r2 @ w3 + b3

    # f32 path (exact check vs. reference).
    out = jax.block_until_ready(three_layer_network(x, params))
    ref = reference(x)
    assert out.shape == (N, D_out)
    assert jnp.allclose(out, ref, atol=1e-5, rtol=1e-5)

    # Ragged batch (N not a multiple of the tile): cdiv grid, masked edge block.
    x_r = jax.random.normal(kr, (200, D_in), dtype=jnp.float32)
    out_r = jax.block_until_ready(three_layer_network(x_r, params))
    assert out_r.shape == (200, D_out)
    assert jnp.allclose(out_r, reference(x_r), atol=1e-5, rtol=1e-5)

    # bf16 operands + f32 accumulation (recommended on v6e/v7x), looser check.
    out_bf16 = jax.block_until_ready(
        three_layer_network(x, params, compute_dtype=jnp.bfloat16))
    assert out_bf16.shape == (N, D_out)
    assert jnp.allclose(out_bf16, ref, atol=1e-1, rtol=1e-1)

    print("KERNEL_OK")
</pallas_src>

<mosaic_0001>
module attributes {stable_mosaic.version = 11 : i64} {
  func.func @mlp_kernel(%arg0: i32, %arg1: memref<256x16xf32, #tpu.memory_space<vmem>>, %arg2: memref<16x128xf32, #tpu.memory_space<vmem>>, %arg3: memref<1x128xf32, #tpu.memory_space<vmem>>, %arg4: memref<128x128xf32, #tpu.memory_space<vmem>>, %arg5: memref<1x128xf32, #tpu.memory_space<vmem>>, %arg6: memref<128x128xf32, #tpu.memory_space<vmem>>, %arg7: memref<1x128xf32, #tpu.memory_space<vmem>>, %arg8: memref<256x128xf32, #tpu.memory_space<vmem>>) attributes {dimension_semantics = [#tpu.dimension_semantics<parallel>], iteration_bounds = array<i64: 2>, scalar_prefetch = 0 : i64, scratch_operands = 0 : i64, tpu.core_type = #tpu.core_type<tc>, window_params = [{transform_indices = @transform_0, window_bounds = array<i64: 256, 16>}, {pipeline_mode = #tpu.pipeline_mode<synchronous>, transform_indices = @transform_1, window_bounds = array<i64: 16, 128>}, {pipeline_mode = #tpu.pipeline_mode<synchronous>, transform_indices = @transform_2, window_bounds = array<i64: 1, 128>}, {pipeline_mode = #tpu.pipeline_mode<synchronous>, transform_indices = @transform_3, window_bounds = array<i64: 128, 128>}, {pipeline_mode = #tpu.pipeline_mode<synchronous>, transform_indices = @transform_4, window_bounds = array<i64: 1, 128>}, {pipeline_mode = #tpu.pipeline_mode<synchronous>, transform_indices = @transform_5, window_bounds = array<i64: 128, 128>}, {pipeline_mode = #tpu.pipeline_mode<synchronous>, transform_indices = @transform_6, window_bounds = array<i64: 1, 128>}, {transform_indices = @transform_7, window_bounds = array<i64: 256, 128>}]} {
    %c0 = arith.constant 0 : index
    %c0_0 = arith.constant 0 : index
    %0 = vector.load %arg1[%c0, %c0_0] : memref<256x16xf32, #tpu.memory_space<vmem>>, vector<256x16xf32>
    %c0_1 = arith.constant 0 : index
    %c0_2 = arith.constant 0 : index
    %1 = vector.load %arg2[%c0_1, %c0_2] : memref<16x128xf32, #tpu.memory_space<vmem>>, vector<16x128xf32>
    %cst = arith.constant dense<0.000000e+00> : vector<256x128xf32>
    %2 = tpu.matmul %0, %1, %cst {dimension_numbers = #tpu.dot_dimension_numbers<[1], [0], [0], [1], [0, 0, 1, 1], [], []>} : vector<256x16xf32>, vector<16x128xf32>, vector<256x128xf32> -> vector<256x128xf32>
    %c0_3 = arith.constant 0 : index
    %c0_4 = arith.constant 0 : index
    %3 = vector.load %arg3[%c0_3, %c0_4] : memref<1x128xf32, #tpu.memory_space<vmem>>, vector<1x128xf32>
    %4 = vector.broadcast %3 : vector<1x128xf32> to vector<256x128xf32>
    %5 = arith.addf %2, %4 : vector<256x128xf32>
    %cst_5 = arith.constant 0.000000e+00 : f32
    %6 = vector.broadcast %cst_5 : f32 to vector<256x128xf32>
    %7 = arith.maximumf %5, %6 : vector<256x128xf32>
    %c0_6 = arith.constant 0 : index
    %c0_7 = arith.constant 0 : index
    %8 = vector.load %arg4[%c0_6, %c0_7] : memref<128x128xf32, #tpu.memory_space<vmem>>, vector<128x128xf32>
    %cst_8 = arith.constant dense<0.000000e+00> : vector<256x128xf32>
    %9 = tpu.matmul %7, %8, %cst_8 {dimension_numbers = #tpu.dot_dimension_numbers<[1], [0], [0], [1], [0, 0, 1, 1], [], []>} : vector<256x128xf32>, vector<128x128xf32>, vector<256x128xf32> -> vector<256x128xf32>
    %c0_9 = arith.constant 0 : index
    %c0_10 = arith.constant 0 : index
    %10 = vector.load %arg5[%c0_9, %c0_10] : memref<1x128xf32, #tpu.memory_space<vmem>>, vector<1x128xf32>
    %11 = vector.broadcast %10 : vector<1x128xf32> to vector<256x128xf32>
    %12 = arith.addf %9, %11 : vector<256x128xf32>
    %cst_11 = arith.constant 0.000000e+00 : f32
    %13 = vector.broadcast %cst_11 : f32 to vector<256x128xf32>
    %14 = arith.maximumf %12, %13 : vector<256x128xf32>
    %c0_12 = arith.constant 0 : index
    %c0_13 = arith.constant 0 : index
    %15 = vector.load %arg6[%c0_12, %c0_13] : memref<128x128xf32, #tpu.memory_space<vmem>>, vector<128x128xf32>
    %cst_14 = arith.constant dense<0.000000e+00> : vector<256x128xf32>
    %16 = tpu.matmul %14, %15, %cst_14 {dimension_numbers = #tpu.dot_dimension_numbers<[1], [0], [0], [1], [0, 0, 1, 1], [], []>} : vector<256x128xf32>, vector<128x128xf32>, vector<256x128xf32> -> vector<256x128xf32>
    %c0_15 = arith.constant 0 : index
    %c0_16 = arith.constant 0 : index
    %17 = vector.load %arg7[%c0_15, %c0_16] : memref<1x128xf32, #tpu.memory_space<vmem>>, vector<1x128xf32>
    %18 = vector.broadcast %17 : vector<1x128xf32> to vector<256x128xf32>
    %19 = arith.addf %16, %18 : vector<256x128xf32>
    %c0_17 = arith.constant 0 : index
    %c0_18 = arith.constant 0 : index
    %20 = vector.load %arg8[%c0_17, %c0_18] : memref<256x128xf32, #tpu.memory_space<vmem>>, vector<256x128xf32>
    tpu.vector_store %arg8[%c0_17, %c0_18], %19 {strides = array<i32>} : memref<256x128xf32, #tpu.memory_space<vmem>>, vector<256x128xf32>,
    return
  }
  func.func @transform_0(%arg0: i32) -> (i32, i32) {
    %c0_i32 = arith.constant 0 : i32
    %c0_i32_0 = arith.constant 0 : i32
    return %arg0, %c0_i32 : i32, i32
  }
  func.func @transform_1(%arg0: i32) -> (i32, i32) {
    %c0_i32 = arith.constant 0 : i32
    %c0_i32_0 = arith.constant 0 : i32
    %c0_i32_1 = arith.constant 0 : i32
    return %c0_i32, %c0_i32_0 : i32, i32
  }
  func.func @transform_2(%arg0: i32) -> (i32, i32) {
    %c0_i32 = arith.constant 0 : i32
    %c0_i32_0 = arith.constant 0 : i32
    %c0_i32_1 = arith.constant 0 : i32
    return %c0_i32, %c0_i32_0 : i32, i32
  }
  func.func @transform_3(%arg0: i32) -> (i32, i32) {
    %c0_i32 = arith.constant 0 : i32
    %c0_i32_0 = arith.constant 0 : i32
    %c0_i32_1 = arith.constant 0 : i32
    return %c0_i32, %c0_i32_0 : i32, i32
  }
  func.func @transform_4(%arg0: i32) -> (i32, i32) {
    %c0_i32 = arith.constant 0 : i32
    %c0_i32_0 = arith.constant 0 : i32
    %c0_i32_1 = arith.constant 0 : i32
    return %c0_i32, %c0_i32_0 : i32, i32
  }
  func.func @transform_5(%arg0: i32) -> (i32, i32) {
    %c0_i32 = arith.constant 0 : i32
    %c0_i32_0 = arith.constant 0 : i32
    %c0_i32_1 = arith.constant 0 : i32
    return %c0_i32, %c0_i32_0 : i32, i32
  }
  func.func @transform_6(%arg0: i32) -> (i32, i32) {
    %c0_i32 = arith.constant 0 : i32
    %c0_i32_0 = arith.constant 0 : i32
    %c0_i32_1 = arith.constant 0 : i32
    return %c0_i32, %c0_i32_0 : i32, i32
  }
  func.func @transform_7(%arg0: i32) -> (i32, i32) {
    %c0_i32 = arith.constant 0 : i32
    %c0_i32_0 = arith.constant 0 : i32
    return %arg0, %c0_i32 : i32, i32
  }
}

</mosaic_0001>

<llo_original>
// kernel: three_layer_network.1
$region0: #{three_layer_network.1}
  #allocation0 [shape = 'u32[]', space=smem, size = 0x4, offset = 0x4, fixed_abs, tag = 'smem constant byte address 0x4 - core index']
  #allocation1 [shape = 'u32[144,128]{1,0:T(1,128)}', space=vmem, size = 0x12000, scoped, tag = 'internal scratch']
  %s0 = inlined_call_operand.vmem [shape: f32[512,16], index: 0, kind: input, shape index: {}]
  %s1 = inlined_call_operand.vmem [shape: f32[16,128], index: 1, kind: input, shape index: {}]
  %s2 = inlined_call_operand.vmem [shape: f32[1,128], index: 2, kind: input, shape index: {}]
  %s3 = inlined_call_operand.vmem [shape: f32[128,128], index: 3, kind: input, shape index: {}]
  %s4 = inlined_call_operand.vmem [shape: f32[1,128], index: 4, kind: input, shape index: {}]
  %s5 = inlined_call_operand.vmem [shape: f32[128,128], index: 5, kind: input, shape index: {}]
  %s6 = inlined_call_operand.vmem [shape: f32[1,128], index: 6, kind: input, shape index: {}]
  %s7 = inlined_call_operand.vmem [shape: f32[512,128], index: 7, kind: output, shape index: {}]
  %s8 = sld [smem:[#allocation0]]
  $region61: #{three_layer_network.1} parent=0
    _
  %s10 = ssub.s32 1, %s8
  %s11 = scalar_select 0, %s10, %s8
  loop: start=0, step=1, limit=4
  $region2: #{three_layer_network.1} parent=0 // loop_pre_header
    _
  $region3: #{three_layer_network.1} parent=0 // loop_header
    %s13 = sphi 0, %s17
    %p14 = scmp.ge.s32.totalorder %s13, 4
    %s23 = sphi 0, %s25
    %s26 = sphi 0, %s23
    %s27 = sphi 0, %s26
    %s43 = sphi 0, %s27
    %s47 = sphi 0, %s47
    %s49 = sphi 0, %s47
    %s50 = sphi 0, %s49
    %s64 = sphi 0, %s50
    %s68 = sphi 0, %s68
    %s70 = sphi 0, %s68
    %s71 = sphi 0, %s70
    %s85 = sphi 0, %s71
    %s89 = sphi 0, %s89
    %s91 = sphi 0, %s89
    %s92 = sphi 0, %s91
    %s106 = sphi 0, %s92
    %s110 = sphi 0, %s110
    %s112 = sphi 0, %s110
    %s113 = sphi 0, %s112
    %s127 = sphi 0, %s113
    %s131 = sphi 0, %s131
    %s133 = sphi 0, %s131
    %s134 = sphi 0, %s133
    %s148 = sphi 0, %s134
    %s152 = sphi 0, %s152
    %s154 = sphi 0, %s152
    %s155 = sphi 0, %s154
    %s169 = sphi 0, %s155
    %s175 = sphi 0, %s177
    %s178 = sphi 0, %s175
    %s179 = sphi 0, %s178
    %s195 = sphi 0, %s179
  $region4: #{three_layer_network.1} parent=0 // loop_header_branch
    %16 = sbr.rel (%p14) target = $region8
  $region5: #{three_layer_network.1} parent=0 // loop_body
    %s18 = ssub.s32 %s13, 1
    %s19 = ssub.s32 %s13, 2
    %s20 = sadd.s32 %s13, 1
    %s21 = ssub.s32 %s13, %s20
    %p22 = scmp.eq.s32.totalorder %s21, 0
    %s24 = sadd.s32 %s23, 1
    %s25 = scalar_select %p22, %s23, %s24
    %p28 = pneg %p22
    %p29 = scmp.eq.s32.totalorder %s13, 1
    %p30 = por %p28, %p29
    %p31 = scmp.ne.s32.totalorder %s23, %s26
    %p32 = scmp.eq.s32.totalorder %s13, 0
    %p33 = por %p31, %p32
    %p34 = scmp.ne.s32.totalorder %s23, %s26
    %p35 = scmp.eq.s32.totalorder %s18, 1
    %p36 = por %p34, %p35
    %p37 = scmp.ne.s32.totalorder %s26, %s27
    %p38 = scmp.eq.s32.totalorder %s18, 0
    %p39 = por %p37, %p38
    %p40 = scmp.ne.s32.totalorder %s26, %s27
    %p41 = scmp.eq.s32.totalorder %s19, 1
    %p42 = por %p40, %p41
    %p44 = scmp.ne.s32.totalorder %s27, %s43
    %p45 = scmp.eq.s32.totalorder %s19, 0
    %p46 = por %p44, %p45
    %s48 = sadd.s32 %s47, 1
    %p51 = scmp.eq.s32.totalorder %s13, 1
    %p52 = scmp.ne.s32.totalorder %s47, %s49
    %p53 = scmp.eq.s32.totalorder %s13, 0
    %p54 = por %p52, %p53
    %p55 = scmp.ne.s32.totalorder %s47, %s49
    %p56 = scmp.eq.s32.totalorder %s18, 1
    %p57 = por %p55, %p56
    %p58 = scmp.ne.s32.totalorder %s49, %s50
    %p59 = scmp.eq.s32.totalorder %s18, 0
    %p60 = por %p58, %p59
    %p61 = scmp.ne.s32.totalorder %s49, %s50
    %p62 = scmp.eq.s32.totalorder %s19, 1
    %p63 = por %p61, %p62
    %p65 = scmp.ne.s32.totalorder %s50, %s64
    %p66 = scmp.eq.s32.totalorder %s19, 0
    %p67 = por %p65, %p66
    %s69 = sadd.s32 %s68, 1
    %p72 = scmp.eq.s32.totalorder %s13, 1
    %p73 = scmp.ne.s32.totalorder %s68, %s70
    %p74 = scmp.eq.s32.totalorder %s13, 0
    %p75 = por %p73, %p74
    %p76 = scmp.ne.s32.totalorder %s68, %s70
    %p77 = scmp.eq.s32.totalorder %s18, 1
    %p78 = por %p76, %p77
    %p79 = scmp.ne.s32.totalorder %s70, %s71
    %p80 = scmp.eq.s32.totalorder %s18, 0
    %p81 = por %p79, %p80
    %p82 = scmp.ne.s32.totalorder %s70, %s71
    %p83 = scmp.eq.s32.totalorder %s19, 1
    %p84 = por %p82, %p83
    %p86 = scmp.ne.s32.totalorder %s71, %s85
    %p87 = scmp.eq.s32.totalorder %s19, 0
    %p88 = por %p86, %p87
    %s90 = sadd.s32 %s89, 1
    %p93 = scmp.eq.s32.totalorder %s13, 1
    %p94 = scmp.ne.s32.totalorder %s89, %s91
    %p95 = scmp.eq.s32.totalorder %s13, 0
    %p96 = por %p94, %p95
    %p97 = scmp.ne.s32.totalorder %s89, %s91
    %p98 = scmp.eq.s32.totalorder %s18, 1
    %p99 = por %p97, %p98
    %p100 = scmp.ne.s32.totalorder %s91, %s92
    %p101 = scmp.eq.s32.totalorder %s18, 0
    %p102 = por %p100, %p101
    %p103 = scmp.ne.s32.totalorder %s91, %s92
    %p104 = scmp.eq.s32.totalorder %s19, 1
    %p105 = por %p103, %p104
    %p107 = scmp.ne.s32.totalorder %s92, %s106
    %p108 = scmp.eq.s32.totalorder %s19, 0
    %p109 = por %p107, %p108
    %s111 = sadd.s32 %s110, 1
    %p114 = scmp.eq.s32.totalorder %s13, 1
    %p115 = scmp.ne.s32.totalorder %s110, %s112
    %p116 = scmp.eq.s32.totalorder %s13, 0
    %p117 = por %p115, %p116
    %p118 = scmp.ne.s32.totalorder %s110, %s112
    %p119 = scmp.eq.s32.totalorder %s18, 1
    %p120 = por %p118, %p119
    %p121 = scmp.ne.s32.totalorder %s112, %s113
    %p122 = scmp.eq.s32.totalorder %s18, 0
    %p123 = por %p121, %p122
    %p124 = scmp.ne.s32.totalorder %s112, %s113
    %p125 = scmp.eq.s32.totalorder %s19, 1
    %p126 = por %p124, %p125
    %p128 = scmp.ne.s32.totalorder %s113, %s127
    %p129 = scmp.eq.s32.totalorder %s19, 0
    %p130 = por %p128, %p129
    %s132 = sadd.s32 %s131, 1
    %p135 = scmp.eq.s32.totalorder %s13, 1
    %p136 = scmp.ne.s32.totalorder %s131, %s133
    %p137 = scmp.eq.s32.totalorder %s13, 0
    %p138 = por %p136, %p137
    %p139 = scmp.ne.s32.totalorder %s131, %s133
    %p140 = scmp.eq.s32.totalorder %s18, 1
    %p141 = por %p139, %p140
    %p142 = scmp.ne.s32.totalorder %s133, %s134
    %p143 = scmp.eq.s32.totalorder %s18, 0
    %p144 = por %p142, %p143
    %p145 = scmp.ne.s32.totalorder %s133, %s134
    %p146 = scmp.eq.s32.totalorder %s19, 1
    %p147 = por %p145, %p146
    %p149 = scmp.ne.s32.totalorder %s134, %s148
    %p150 = scmp.eq.s32.totalorder %s19, 0
    %p151 = por %p149, %p150
    %s153 = sadd.s32 %s152, 1
    %p156 = scmp.eq.s32.totalorder %s13, 1
    %p157 = scmp.ne.s32.totalorder %s152, %s154
    %p158 = scmp.eq.s32.totalorder %s13, 0
    %p159 = por %p157, %p158
    %p160 = scmp.ne.s32.totalorder %s152, %s154
    %p161 = scmp.eq.s32.totalorder %s18, 1
    %p162 = por %p160, %p161
    %p163 = scmp.ne.s32.totalorder %s154, %s155
    %p164 = scmp.eq.s32.totalorder %s18, 0
    %p165 = por %p163, %p164
    %p166 = scmp.ne.s32.totalorder %s154, %s155
    %p167 = scmp.eq.s32.totalorder %s19, 1
    %p168 = por %p166, %p167
    %p170 = scmp.ne.s32.totalorder %s155, %s169
    %p171 = scmp.eq.s32.totalorder %s19, 0
    %p172 = por %p170, %p171
    %s173 = ssub.s32 %s13, %s20
    %p174 = scmp.eq.s32.totalorder %s173, 0
    %s176 = sadd.s32 %s175, 1
    %s177 = scalar_select %p174, %s175, %s176
    %p180 = pneg %p174
    %p181 = scmp.eq.s32.totalorder %s13, 1
    %p182 = por %p180, %p181
    %p183 = scmp.ne.s32.totalorder %s175, %s178
    %p184 = scmp.eq.s32.totalorder %s13, 0
    %p185 = por %p183, %p184
    %p186 = scmp.ne.s32.totalorder %s175, %s178
    %p187 = scmp.eq.s32.totalorder %s18, 1
    %p188 = por %p186, %p187
    %p189 = scmp.ne.s32.totalorder %s178, %s179
    %p190 = scmp.eq.s32.totalorder %s18, 0
    %p191 = por %p189, %p190
    %p192 = scmp.ne.s32.totalorder %s178, %s179
    %p193 = scmp.eq.s32.totalorder %s19, 1
    %p194 = por %p192, %p193
    %p196 = scmp.ne.s32.totalorder %s179, %s195
    %p197 = scmp.eq.s32.totalorder %s19, 0
    %p198 = por %p196, %p197
    %p199 = scmp.le.s32.totalorder 1, %s13
    %p200 = scmp.lt.s32.totalorder %s13, 3
    %p201 = pnand %p199, %p200
    %p202 = pneg %p201
    // Predicated region
    $region9: #{three_layer_network.1} parent=5 // pred_check
      _
    $region10: #{three_layer_network.1} parent=5 // pred_check_branch
      %204 = sbr.rel (%p201) target = $region12
    $region11: #{three_layer_network.1} parent=5 // pred_region
      %s205 = ssub.s32 %s13, 1
      // Predicated region
      $region13: #{three_layer_network.1} parent=11 // pred_check
        %p206 = pneg %p60
      $region14: #{three_layer_network.1} parent=11 // pred_check_branch
        %208 = sbr.rel (%p206) target = $region16
      $region15: #{three_layer_network.1} parent=11 // pred_region
        _
      $region16: #{three_layer_network.1} parent=11 // pred_fallthru
        _
      // Predicated region
      $region17: #{three_layer_network.1} parent=11 // pred_check
        %p209 = pneg %p81
      $region18: #{three_layer_network.1} parent=11 // pred_check_branch
        %211 = sbr.rel (%p209) target = $region20
      $region19: #{three_layer_network.1} parent=11 // pred_region
        _
      $region20: #{three_layer_network.1} parent=11 // pred_fallthru
        _
      // Predicated region
      $region21: #{three_layer_network.1} parent=11 // pred_check
        %p212 = pneg %p102
      $region22: #{three_layer_network.1} parent=11 // pred_check_branch
        %214 = sbr.rel (%p212) target = $region24
      $region23: #{three_layer_network.1} parent=11 // pred_region
        _
      $region24: #{three_layer_network.1} parent=11 // pred_fallthru
        _
      // Predicated region
      $region25: #{three_layer_network.1} parent=11 // pred_check
        %p215 = pneg %p123
      $region26: #{three_layer_network.1} parent=11 // pred_check_branch
        %217 = sbr.rel (%p215) target = $region28
      $region27: #{three_layer_network.1} parent=11 // pred_region
        _
      $region28: #{three_layer_network.1} parent=11 // pred_fallthru
        _
      // Predicated region
      $region29: #{three_layer_network.1} parent=11 // pred_check
        %p218 = pneg %p144
      $region30: #{three_layer_network.1} parent=11 // pred_check_branch
        %220 = sbr.rel (%p218) target = $region32
      $region31: #{three_layer_network.1} parent=11 // pred_region
        _
      $region32: #{three_layer_network.1} parent=11 // pred_fallthru
        _
      // Predicated region
      $region33: #{three_layer_network.1} parent=11 // pred_check
        %p221 = pneg %p165
      $region34: #{three_layer_network.1} parent=11 // pred_check_branch
        %223 = sbr.rel (%p221) target = $region36
      $region35: #{three_layer_network.1} parent=11 // pred_region
        _
      $region36: #{three_layer_network.1} parent=11 // pred_fallthru
        _
    $region12: #{three_layer_network.1} parent=5 // pred_fallthru
      _
    %p224 = scmp.lt.s32.totalorder %s13, 2
    // Predicated region
    $region37: #{three_layer_network.1} parent=5 // pred_check
      %p225 = pneg %p224
    $region38: #{three_layer_network.1} parent=5 // pred_check_branch
      %227 = sbr.rel (%p225) target = $region40
    $region39: #{three_layer_network.1} parent=5 // pred_region
      // Predicated region
      $region41: #{three_layer_network.1} parent=39 // pred_check
        %p228 = pneg %p33
      $region42: #{three_layer_network.1} parent=39 // pred_check_branch
        %230 = sbr.rel (%p228) target = $region44
      $region43: #{three_layer_network.1} parent=39 // pred_region
        %s231 = smul.u32 32, %s13
        %p232 = scmp.lt.s32.totalorder %s231, 63
        %s233 = scalar_select %p232, %s231, 63
        %s234 = smul.addr %s233, 8
        %s235 = scalar_lea.vmem %s0, %s234
        %s236 = smul.u32 32, %s13
      $region44: #{three_layer_network.1} parent=39 // pred_fallthru
        _
    $region40: #{three_layer_network.1} parent=5 // pred_fallthru
      _
    %p237 = scmp.le.s32.totalorder 1, %s13
    %p238 = scmp.lt.s32.totalorder %s13, 3
    %p239 = pnand %p237, %p238
    %p240 = pneg %p239
    // Predicated region
    $region45: #{three_layer_network.1} parent=5 // pred_check
      _
    $region46: #{three_layer_network.1} parent=5 // pred_check_branch
      %242 = sbr.rel (%p239) target = $region48
    $region47: #{three_layer_network.1} parent=5 // pred_region
      %s243 = ssub.s32 %s13, 1
      %s244 = smul.u32 32, %s18
      %p245 = scmp.lt.s32.totalorder %s244, 63
      %s246 = scalar_select %p245, %s244, 63
      %s247 = smul.addr %s246, 8
      %s248 = scalar_lea.vmem %s0, %s247
      %p249 = pneg %p39
      %p250 = pneg %p36
      %p251 = pneg %p60
      %p252 = pneg %p57
      %p253 = pneg %p81
      %p254 = pneg %p78
      %p255 = pneg %p102
      %p256 = pneg %p99
      %p257 = pneg %p123
      %p258 = pneg %p120
      %p259 = pneg %p144
      %p260 = pneg %p141
      %p261 = pneg %p165
      %p262 = pneg %p162
      %p263 = pneg %p191
      %p264 = pneg %p188
      %s265 = smul.u32 32, %s18
      %p266 = scmp.lt.s32.totalorder %s265, 63
      %s267 = scalar_select %p266, %s265, 63
      %s268 = smul.addr %s267, 8
      %s269 = scalar_lea.vmem %s7, %s268
      %s270 = smul.u32 32, %s18
      %p271 = scmp.lt.s32.totalorder %s270, 63
      %s272 = scalar_select %p271, %s270, 63
      %s273 = smul.addr %s272, 8
      %s274 = scalar_lea.vmem %s0, %s273
      %s275 = smul.u32 32, %s18
      %s276 = smul.u32 32, %s18
      %p277 = scmp.lt.s32.totalorder %s276, 63
      %s278 = scalar_select %p277, %s276, 63
      %s279 = smul.addr %s278, 8
      %s280 = scalar_lea.vmem %s7, %s279
      %s281 = smul.u32 32, %s18
      %v282 = vld [vmem:[%s274] sm:$0xff]
      %v283 = vld [vmem:[%s274 + $0x8] sm:$0xff]
      %v284 = vld [vmem:[%s274 + $0x10] sm:$0xff]
      %v285 = vld [vmem:[%s274 + $0x18] sm:$0xff]
      %v286 = vld [vmem:[%s274 + $0x20] sm:$0xff]
      %v287 = vld [vmem:[%s274 + $0x28] sm:$0xff]
      %v288 = vld [vmem:[%s274 + $0x30] sm:$0xff]
      %v289 = vld [vmem:[%s274 + $0x38] sm:$0xff]
      %v290 = vld [vmem:[%s274 + $0x40] sm:$0xff]
      %v291 = vld [vmem:[%s274 + $0x48] sm:$0xff]
      %v292 = vld [vmem:[%s274 + $0x50] sm:$0xff]
      %v293 = vld [vmem:[%s274 + $0x58] sm:$0xff]
      %v294 = vld [vmem:[%s274 + $0x60] sm:$0xff]
      %v295 = vld [vmem:[%s274 + $0x68] sm:$0xff]
      %v296 = vld [vmem:[%s274 + $0x70] sm:$0xff]
      %v297 = vld [vmem:[%s274 + $0x78] sm:$0xff]
      %v298 = vld [vmem:[%s274 + $0x80] sm:$0xff]
      %v299 = vld [vmem:[%s274 + $0x88] sm:$0xff]
      %v300 = vld [vmem:[%s274 + $0x90] sm:$0xff]
      %v301 = vld [vmem:[%s274 + $0x98] sm:$0xff]
      %v302 = vld [vmem:[%s274 + $0xa0] sm:$0xff]
      %v303 = vld [vmem:[%s274 + $0xa8] sm:$0xff]
      %v304 = vld [vmem:[%s274 + $0xb0] sm:$0xff]
      %v305 = vld [vmem:[%s274 + $0xb8] sm:$0xff]
      %v306 = vld [vmem:[%s274 + $0xc0] sm:$0xff]
      %v307 = vld [vmem:[%s274 + $0xc8] sm:$0xff]
      %v308 = vld [vmem:[%s274 + $0xd0] sm:$0xff]
      %v309 = vld [vmem:[%s274 + $0xd8] sm:$0xff]
      %v310 = vld [vmem:[%s274 + $0xe0] sm:$0xff]
      %v311 = vld [vmem:[%s274 + $0xe8] sm:$0xff]
      %v312 = vld [vmem:[%s274 + $0xf0] sm:$0xff]
      %v313 = vld [vmem:[%s274 + $0xf8] sm:$0xff]
      %v314 = vld [vmem:[%s1] sm:$0xff]
      %v315 = vld [vmem:[%s1 + $0x8] sm:$0xff]
      %v316 = vld [vmem:[%s2] sm:$0x1]
      %v318 = vlaneseq
      %v319 = vshrl.u32 %v318, 7
      %v320 = vsub.s32 0, %v319
      %v321 = vrot.slane %v316, %v320
      %vm323 = vcmask 130048
      %v325 = vsel %vm323, %v282, 0
      %v328 = vsel %vm323, %v283, 0
      %v331 = vsel %vm323, %v284, 0
      %v334 = vsel %vm323, %v285, 0
      %v337 = vsel %vm323, %v286, 0
      %v340 = vsel %vm323, %v287, 0
      %v343 = vsel %vm323, %v288, 0
      %v346 = vsel %vm323, %v289, 0
      %v349 = vsel %vm323, %v290, 0
      %v352 = vsel %vm323, %v291, 0
      %v355 = vsel %vm323, %v292, 0
      %v358 = vsel %vm323, %v293, 0
      %v361 = vsel %vm323, %v294, 0
      %v364 = vsel %vm323, %v295, 0
      %v367 = vsel %vm323, %v296, 0
      %v370 = vsel %vm323, %v297, 0
      %v373 = vsel %vm323, %v298, 0
      %v376 = vsel %vm323, %v299, 0
      %v379 = vsel %vm323, %v300, 0
      %v382 = vsel %vm323, %v301, 0
      %v385 = vsel %vm323, %v302, 0
      %v388 = vsel %vm323, %v303, 0
      %v391 = vsel %vm323, %v304, 0
      %v394 = vsel %vm323, %v305, 0
      %v397 = vsel %vm323, %v306, 0
      %v400 = vsel %vm323, %v307, 0
      %v403 = vsel %vm323, %v308, 0
      %v406 = vsel %vm323, %v309, 0
      %v409 = vsel %vm323, %v310, 0
      %v412 = vsel %vm323, %v311, 0
      %v415 = vsel %vm323, %v312, 0
      %v418 = vsel %vm323, %v313, 0
      %420 = vmatprep.subr.mxu0 0.0
      %421 = vmatpush1.msra.mxu0 %v314
      %422 = vmatprep.subr.mxu0 0.0
      %423 = vmatpush1.msra.mxu0 %v315
      %424 = vmatprep.subr.mxu0 0.0
      %425 = vmatpush1.msra.mxu0 0.0
      %426 = vmatprep.subr.mxu0 0.0
      %427 = vmatpush1.msra.mxu0 0.0
      %428 = vmatprep.subr.mxu0 0.0
      %429 = vmatpush1.msra.mxu0 0.0
      %430 = vmatprep.subr.mxu0 0.0
      %431 = vmatpush1.msra.mxu0 0.0
      %432 = vmatprep.subr.mxu0 0.0
      %433 = vmatpush1.msra.mxu0 0.0
      %434 = vmatprep.subr.mxu0 0.0
      %435 = vmatpush1.msra.mxu0 0.0
      %436 = vmatprep.subr.mxu0 0.0
      %437 = vmatpush1.msra.mxu0 0.0
      %438 = vmatprep.subr.mxu0 0.0
      %439 = vmatpush1.msra.mxu0 0.0
      %440 = vmatprep.subr.mxu0 0.0
      %441 = vmatpush1.msra.mxu0 0.0
      %442 = vmatprep.subr.mxu0 0.0
      %443 = vmatpush1.msra.mxu0 0.0
      %444 = vmatprep.subr.mxu0 0.0
      %445 = vmatpush1.msra.mxu0 0.0
      %446 = vmatprep.subr.mxu0 0.0
      %447 = vmatpush1.msra.mxu0 0.0
      %448 = vmatprep.subr.mxu0 0.0
      %449 = vmatpush1.msra.mxu0 0.0
      %450 = vmatprep.subr.mxu0 0.0
      %451 = vmatpush1.msra.mxu0 0.0
      %452 = vmatprep.subr.mxu0 0.0
      %453 = vmatpush1.msra.mxu0 0.0
      %454 = vmatprep.subr.mxu0 0.0
      %455 = vmatpush1.msra.mxu0 0.0
      %456 = vmatprep.subr.mxu0 0.0
      %457 = vmatpush1.msra.mxu0 0.0
      %458 = vmatprep.subr.mxu0 0.0
      %459 = vmatpush1.msra.mxu0 0.0
      %460 = vmatprep.subr.mxu0 0.0
      %461 = vmatpush1.msra.mxu0 0.0
      %462 = vmatprep.subr.mxu0 0.0
      %463 = vmatpush1.msra.mxu0 0.0
      %464 = vmatprep.subr.mxu0 0.0
      %465 = vmatpush1.msra.mxu0 0.0
      %466 = vmatprep.subr.mxu0 0.0
      %467 = vmatpush1.msra.mxu0 0.0
      %468 = vmatprep.subr.mxu0 0.0
      %469 = vmatpush1.msra.mxu0 0.0
      %470 = vmatprep.subr.mxu0 0.0
      %471 = vmatpush1.msra.mxu0 0.0
      %472 = vmatprep.subr.mxu0 0.0
      %473 = vmatpush1.msra.mxu0 0.0
      %474 = vmatprep.subr.mxu0 0.0
      %475 = vmatpush1.msra.mxu0 0.0
      %476 = vmatprep.subr.mxu0 0.0
      %477 = vmatpush1.msra.mxu0 0.0
      %478 = vmatprep.subr.mxu0 0.0
      %479 = vmatpush1.msra.mxu0 0.0
      %480 = vmatprep.subr.mxu0 0.0
      %481 = vmatpush1.msra.mxu0 0.0
      %482 = vmatprep.subr.mxu0 0.0
      %483 = vmatpush1.msra.mxu0 0.0
      %484 = vmatprep.mubr.f32.mxu0 0.0
      %485 = vmatmul.mubr.f32.gmra.mrb[0].mxu0 %v325
      %v486 = vpop.f32.mrb[0].mxu0
      %v487 = vadd.f32 %v321, %v486
      %v488 = vpop.f32.mrb[0].mxu0
      %489 = vmatprep.mubr.f32.mxu0 0.0
      %490 = vmatmul.mubr.f32.gmra.mrb[0].mxu0 %v328
      %v491 = vpop.f32.mrb[0].mxu0
      %v492 = vadd.f32 %v321, %v491
      %v493 = vpop.f32.mrb[0].mxu0
      %494 = vmatprep.mubr.f32.mxu0 0.0
      %495 = vmatmul.mubr.f32.gmra.mrb[0].mxu0 %v331
      %v496 = vpop.f32.mrb[0].mxu0
      %v497 = vadd.f32 %v321, %v496
      %v498 = vpop.f32.mrb[0].mxu0
      %499 = vmatprep.mubr.f32.mxu0 0.0
      %500 = vmatmul.mubr.f32.gmra.mrb[0].mxu0 %v334
      %v501 = vpop.f32.mrb[0].mxu0
      %v502 = vadd.f32 %v321, %v501
      %v503 = vpop.f32.mrb[0].mxu0
      %504 = vmatprep.mubr.f32.mxu0 0.0
      %505 = vmatmul.mubr.f32.gmra.mrb[0].mxu0 %v337
      %v506 = vpop.f32.mrb[0].mxu0
      %v507 = vadd.f32 %v321, %v506
      %v508 = vpop.f32.mrb[0].mxu0
      %509 = vmatprep.mubr.f32.mxu0 0.0
      %510 = vmatmul.mubr.f32.gmra.mrb[0].mxu0 %v340
      %v511 = vpop.f32.mrb[0].mxu0
      %v512 = vadd.f32 %v321, %v511
      %v513 = vpop.f32.mrb[0].mxu0
      %514 = vmatprep.mubr.f32.mxu0 0.0
      %515 = vmatmul.mubr.f32.gmra.mrb[0].mxu0 %v343
      %v516 = vpop.f32.mrb[0].mxu0
      %v517 = vadd.f32 %v321, %v516
      %v518 = vpop.f32.mrb[0].mxu0
      %519 = vmatprep.mubr.f32.mxu0 0.0
      %520 = vmatmul.mubr.f32.gmra.mrb[0].mxu0 %v346
      %v521 = vpop.f32.mrb[0].mxu0
      %v522 = vadd.f32 %v321, %v521
      %v523 = vpop.f32.mrb[0].mxu0
      %524 = vmatprep.mubr.f32.mxu0 0.0
      %525 = vmatmul.mubr.f32.gmra.mrb[0].mxu0 %v349
      %v526 = vpop.f32.mrb[0].mxu0
      %v527 = vadd.f32 %v321, %v526
      %v528 = vpop.f32.mrb[0].mxu0
      %529 = vmatprep.mubr.f32.mxu0 0.0
      %530 = vmatmul.mubr.f32.gmra.mrb[0].mxu0 %v352
      %v531 = vpop.f32.mrb[0].mxu0
      %v532 = vadd.f32 %v321, %v531
      %v533 = vpop.f32.mrb[0].mxu0
      %534 = vmatprep.mubr.f32.mxu0 0.0
      %535 = vmatmul.mubr.f32.gmra.mrb[0].mxu0 %v355
      %v536 = vpop.f32.mrb[0].mxu0
      %v537 = vadd.f32 %v321, %v536
      %v538 = vpop.f32.mrb[0].mxu0
      %539 = vmatprep.mubr.f32.mxu0 0.0
      %540 = vmatmul.mubr.f32.gmra.mrb[0].mxu0 %v358
      %v541 = vpop.f32.mrb[0].mxu0
      %v542 = vadd.f32 %v321, %v541
      %v543 = vpop.f32.mrb[0].mxu0
      %544 = vmatprep.mubr.f32.mxu0 0.0
      %545 = vmatmul.mubr.f32.gmra.mrb[0].mxu0 %v361
      %v546 = vpop.f32.mrb[0].mxu0
      %v547 = vadd.f32 %v321, %v546
      %v548 = vpop.f32.mrb[0].mxu0
      %549 = vmatprep.mubr.f32.mxu0 0.0
      %550 = vmatmul.mubr.f32.gmra.mrb[0].mxu0 %v364
      %v551 = vpop.f32.mrb[0].mxu0
      %v552 = vadd.f32 %v321, %v551
      %v553 = vpop.f32.mrb[0].mxu0
      %554 = vmatprep.mubr.f32.mxu0 0.0
      %555 = vmatmul.mubr.f32.gmra.mrb[0].mxu0 %v367
      %v556 = vpop.f32.mrb[0].mxu0
      %v557 = vadd.f32 %v321, %v556
      %v558 = vpop.f32.mrb[0].mxu0
      %559 = vmatprep.mubr.f32.mxu0 0.0
      %560 = vmatmul.mubr.f32.gmra.mrb[0].mxu0 %v370
      %v561 = vpop.f32.mrb[0].mxu0
      %v562 = vadd.f32 %v321, %v561
      %v563 = vpop.f32.mrb[0].mxu0
      %564 = vmatprep.mubr.f32.mxu0 0.0
      %565 = vmatmul.mubr.f32.gmra.mrb[0].mxu0 %v373
      %v566 = vpop.f32.mrb[0].mxu0
      %v567 = vadd.f32 %v321, %v566
      %v568 = vpop.f32.mrb[0].mxu0
      %569 = vmatprep.mubr.f32.mxu0 0.0
      %570 = vmatmul.mubr.f32.gmra.mrb[0].mxu0 %v376
      %v571 = vpop.f32.mrb[0].mxu0
      %v572 = vadd.f32 %v321, %v571
      %v573 = vpop.f32.mrb[0].mxu0
      %574 = vmatprep.mubr.f32.mxu0 0.0
      %575 = vmatmul.mubr.f32.gmra.mrb[0].mxu0 %v379
      %v576 = vpop.f32.mrb[0].mxu0
      %v577 = vadd.f32 %v321, %v576
      %v578 = vpop.f32.mrb[0].mxu0
      %579 = vmatprep.mubr.f32.mxu0 0.0
      %580 = vmatmul.mubr.f32.gmra.mrb[0].mxu0 %v382
      %v581 = vpop.f32.mrb[0].mxu0
      %v582 = vadd.f32 %v321, %v581
      %v583 = vpop.f32.mrb[0].mxu0
      %584 = vmatprep.mubr.f32.mxu0 0.0
      %585 = vmatmul.mubr.f32.gmra.mrb[0].mxu0 %v385
      %v586 = vpop.f32.mrb[0].mxu0
      %v587 = vadd.f32 %v321, %v586
      %v588 = vpop.f32.mrb[0].mxu0
      %589 = vmatprep.mubr.f32.mxu0 0.0
      %590 = vmatmul.mubr.f32.gmra.mrb[0].mxu0 %v388
      %v591 = vpop.f32.mrb[0].mxu0
      %v592 = vadd.f32 %v321, %v591
      %v593 = vpop.f32.mrb[0].mxu0
      %594 = vmatprep.mubr.f32.mxu0 0.0
      %595 = vmatmul.mubr.f32.gmra.mrb[0].mxu0 %v391
      %v596 = vpop.f32.mrb[0].mxu0
      %v597 = vadd.f32 %v321, %v596
      %v598 = vpop.f32.mrb[0].mxu0
      %599 = vmatprep.mubr.f32.mxu0 0.0
      %600 = vmatmul.mubr.f32.gmra.mrb[0].mxu0 %v394
      %v601 = vpop.f32.mrb[0].mxu0
      %v602 = vadd.f32 %v321, %v601
      %v603 = vpop.f32.mrb[0].mxu0
      %604 = vmatprep.mubr.f32.mxu0 0.0
      %605 = vmatmul.mubr.f32.gmra.mrb[0].mxu0 %v397
      %v606 = vpop.f32.mrb[0].mxu0
      %v607 = vadd.f32 %v321, %v606
      %v608 = vpop.f32.mrb[0].mxu0
      %609 = vmatprep.mubr.f32.mxu0 0.0
      %610 = vmatmul.mubr.f32.gmra.mrb[0].mxu0 %v400
      %v611 = vpop.f32.mrb[0].mxu0
      %v612 = vadd.f32 %v321, %v611
      %v613 = vpop.f32.mrb[0].mxu0
      %614 = vmatprep.mubr.f32.mxu0 0.0
      %615 = vmatmul.mubr.f32.gmra.mrb[0].mxu0 %v403
      %v616 = vpop.f32.mrb[0].mxu0
      %v617 = vadd.f32 %v321, %v616
      %v618 = vpop.f32.mrb[0].mxu0
      %619 = vmatprep.mubr.f32.mxu0 0.0
      %620 = vmatmul.mubr.f32.gmra.mrb[0].mxu0 %v406
      %v621 = vpop.f32.mrb[0].mxu0
      %v622 = vadd.f32 %v321, %v621
      %v623 = vpop.f32.mrb[0].mxu0
      %624 = vmatprep.mubr.f32.mxu0 0.0
      %625 = vmatmul.mubr.f32.gmra.mrb[0].mxu0 %v409
      %v626 = vpop.f32.mrb[0].mxu0
      %v627 = vadd.f32 %v321, %v626
      %v628 = vpop.f32.mrb[0].mxu0
      %629 = vmatprep.mubr.f32.mxu0 0.0
      %630 = vmatmul.mubr.f32.gmra.mrb[0].mxu0 %v412
      %v631 = vpop.f32.mrb[0].mxu0
      %v632 = vadd.f32 %v321, %v631
      %v633 = vpop.f32.mrb[0].mxu0
      %634 = vmatprep.mubr.f32.mxu0 0.0
      %635 = vmatmul.mubr.f32.gmra.mrb[0].mxu0 %v415
      %v636 = vpop.f32.mrb[0].mxu0
      %v637 = vadd.f32 %v321, %v636
      %v638 = vpop.f32.mrb[0].mxu0
      %639 = vmatprep.mubr.f32.mxu0 0.0
      %640 = vmatmul.mubr.f32.gmra.mrb[0].mxu0 %v418
      %v641 = vpop.f32.mrb[0].mxu0
      %v642 = vadd.f32 %v321, %v641
      %v643 = vpop.f32.mrb[0].mxu0
      %644 = vdwg.mxu0
      %v645 = vmax.f32 %v487, 0.0
      %v646 = vmax.f32 %v492, 0.0
      %v647 = vmax.f32 %v497, 0.0
      %v648 = vmax.f32 %v502, 0.0
      %v649 = vmax.f32 %v507, 0.0
      %v650 = vmax.f32 %v512, 0.0
      %v651 = vmax.f32 %v517, 0.0
      %v652 = vmax.f32 %v522, 0.0
      %v653 = vmax.f32 %v527, 0.0
      %v654 = vmax.f32 %v532, 0.0
      %v655 = vmax.f32 %v537, 0.0
      %v656 = vmax.f32 %v542, 0.0
      %v657 = vmax.f32 %v547, 0.0
      %v658 = vmax.f32 %v552, 0.0
      %v659 = vmax.f32 %v557, 0.0
      %v660 = vmax.f32 %v562, 0.0
      %v661 = vmax.f32 %v567, 0.0
      %v662 = vmax.f32 %v572, 0.0
      %v663 = vmax.f32 %v577, 0.0
      %v664 = vmax.f32 %v582, 0.0
      %v665 = vmax.f32 %v587, 0.0
      %v666 = vmax.f32 %v592, 0.0
      %v667 = vmax.f32 %v597, 0.0
      %v668 = vmax.f32 %v602, 0.0
      %v669 = vmax.f32 %v607, 0.0
      %v670 = vmax.f32 %v612, 0.0
      %v671 = vmax.f32 %v617, 0.0
      %v672 = vmax.f32 %v622, 0.0
      %v673 = vmax.f32 %v627, 0.0
      %v674 = vmax.f32 %v632, 0.0
      %v675 = vmax.f32 %v637, 0.0
      %v676 = vmax.f32 %v642, 0.0
      %v677 = vld [vmem:[%s3] sm:$0xff]
      %v678 = vld [vmem:[%s3 + $0x8] sm:$0xff]
      %v679 = vld [vmem:[%s3 + $0x10] sm:$0xff]
      %v680 = vld [vmem:[%s3 + $0x18] sm:$0xff]
      %v681 = vld [vmem:[%s3 + $0x20] sm:$0xff]
      %v682 = vld [vmem:[%s3 + $0x28] sm:$0xff]
      %v683 = vld [vmem:[%s3 + $0x30] sm:$0xff]
      %v684 = vld [vmem:[%s3 + $0x38] sm:$0xff]
      %v685 = vld [vmem:[%s3 + $0x40] sm:$0xff]
      %v686 = vld [vmem:[%s3 + $0x48] sm:$0xff]
      %v687 = vld [vmem:[%s3 + $0x50] sm:$0xff]
      %v688 = vld [vmem:[%s3 + $0x58] sm:$0xff]
      %v689 = vld [vmem:[%s3 + $0x60] sm:$0xff]
      %v690 = vld [vmem:[%s3 + $0x68] sm:$0xff]
      %v691 = vld [vmem:[%s3 + $0x70] sm:$0xff]
      %v692 = vld [vmem:[%s3 + $0x78] sm:$0xff]
      %v693 = vld [vmem:[%s4] sm:$0x1]
      %v695 = vlaneseq
      %v696 = vshrl.u32 %v695, 7
      %v697 = vsub.s32 0, %v696
      %v698 = vrot.slane %v693, %v697
      %700 = vmatprep.subr.mxu0 0.0
      %701 = vmatpush1.msra.mxu0 %v677
      %702 = vmatprep.subr.mxu0 0.0
      %703 = vmatpush1.msra.mxu0 %v678
      %704 = vmatprep.subr.mxu0 0.0
      %705 = vmatpush1.msra.mxu0 %v679
      %706 = vmatprep.subr.mxu0 0.0
      %707 = vmatpush1.msra.mxu0 %v680
      %708 = vmatprep.subr.mxu0 0.0
      %709 = vmatpush1.msra.mxu0 %v681
      %710 = vmatprep.subr.mxu0 0.0
      %711 = vmatpush1.msra.mxu0 %v682
      %712 = vmatprep.subr.mxu0 0.0
      %713 = vmatpush1.msra.mxu0 %v683
      %714 = vmatprep.subr.mxu0 0.0
      %715 = vmatpush1.msra.mxu0 %v684
      %716 = vmatprep.subr.mxu0 0.0
      %717 = vmatpush1.msra.mxu0 %v685
      %718 = vmatprep.subr.mxu0 0.0
      %719 = vmatpush1.msra.mxu0 %v686
      %720 = vmatprep.subr.mxu0 0.0
      %721 = vmatpush1.msra.mxu0 %v687
      %722 = vmatprep.subr.mxu0 0.0
      %723 = vmatpush1.msra.mxu0 %v688
      %724 = vmatprep.subr.mxu0 0.0
      %725 = vmatpush1.msra.mxu0 %v689
      %726 = vmatprep.subr.mxu0 0.0
      %727 = vmatpush1.msra.mxu0 %v690
      %728 = vmatprep.subr.mxu0 0.0
      %729 = vmatpush1.msra.mxu0 %v691
      %730 = vmatprep.subr.mxu0 0.0
      %731 = vmatpush1.msra.mxu0 %v692
      %732 = vmatprep.subr.mxu0 0.0
      %733 = vmatpush1.msra.mxu0 0.0
      %734 = vmatprep.subr.mxu0 0.0
      %735 = vmatpush1.msra.mxu0 0.0
      %736 = vmatprep.subr.mxu0 0.0
      %737 = vmatpush1.msra.mxu0 0.0
      %738 = vmatprep.subr.mxu0 0.0
      %739 = vmatpush1.msra.mxu0 0.0
      %740 = vmatprep.subr.mxu0 0.0
      %741 = vmatpush1.msra.mxu0 0.0
      %742 = vmatprep.subr.mxu0 0.0
      %743 = vmatpush1.msra.mxu0 0.0
      %744 = vmatprep.subr.mxu0 0.0
      %745 = vmatpush1.msra.mxu0 0.0
      %746 = vmatprep.subr.mxu0 0.0
      %747 = vmatpush1.msra.mxu0 0.0
      %748 = vmatprep.subr.mxu0 0.0
      %749 = vmatpush1.msra.mxu0 0.0
      %750 = vmatprep.subr.mxu0 0.0
      %751 = vmatpush1.msra.mxu0 0.0
      %752 = vmatprep.subr.mxu0 0.0
      %753 = vmatpush1.msra.mxu0 0.0
      %754 = vmatprep.subr.mxu0 0.0
      %755 = vmatpush1.msra.mxu0 0.0
      %756 = vmatprep.subr.mxu0 0.0
      %757 = vmatpush1.msra.mxu0 0.0
      %758 = vmatprep.subr.mxu0 0.0
      %759 = vmatpush1.msra.mxu0 0.0
      %760 = vmatprep.subr.mxu0 0.0
      %761 = vmatpush1.msra.mxu0 0.0
      %762 = vmatprep.subr.mxu0 0.0
      %763 = vmatpush1.msra.mxu0 0.0
      %764 = vmatprep.mubr.f32.mxu0 0.0
      %765 = vmatmul.mubr.f32.gmra.mrb[0].mxu0 %v645
      %v766 = vpop.f32.mrb[0].mxu0
      %v767 = vadd.f32 %v698, %v766
      %v768 = vpop.f32.mrb[0].mxu0
      %769 = vmatprep.mubr.f32.mxu0 0.0
      %770 = vmatmul.mubr.f32.gmra.mrb[0].mxu0 %v646
      %v771 = vpop.f32.mrb[0].mxu0
      %v772 = vadd.f32 %v698, %v771
      %v773 = vpop.f32.mrb[0].mxu0
      %774 = vmatprep.mubr.f32.mxu0 0.0
      %775 = vmatmul.mubr.f32.gmra.mrb[0].mxu0 %v647
      %v776 = vpop.f32.mrb[0].mxu0
      %v777 = vadd.f32 %v698, %v776
      %v778 = vpop.f32.mrb[0].mxu0
      %779 = vmatprep.mubr.f32.mxu0 0.0
      %780 = vmatmul.mubr.f32.gmra.mrb[0].mxu0 %v648
      %v781 = vpop.f32.mrb[0].mxu0
      %v782 = vadd.f32 %v698, %v781
      %v783 = vpop.f32.mrb[0].mxu0
      %784 = vmatprep.mubr.f32.mxu0 0.0
      %785 = vmatmul.mubr.f32.gmra.mrb[0].mxu0 %v649
      %v786 = vpop.f32.mrb[0].mxu0
      %v787 = vadd.f32 %v698, %v786
      %v788 = vpop.f32.mrb[0].mxu0
      %789 = vmatprep.mubr.f32.mxu0 0.0
      %790 = vmatmul.mubr.f32.gmra.mrb[0].mxu0 %v650
      %v791 = vpop.f32.mrb[0].mxu0
      %v792 = vadd.f32 %v698, %v791
      %v793 = vpop.f32.mrb[0].mxu0
      %794 = vmatprep.mubr.f32.mxu0 0.0
      %795 = vmatmul.mubr.f32.gmra.mrb[0].mxu0 %v651
      %v796 = vpop.f32.mrb[0].mxu0
      %v797 = vadd.f32 %v698, %v796
      %v798 = vpop.f32.mrb[0].mxu0
      %799 = vmatprep.mubr.f32.mxu0 0.0
      %800 = vmatmul.mubr.f32.gmra.mrb[0].mxu0 %v652
      %v801 = vpop.f32.mrb[0].mxu0
      %v802 = vadd.f32 %v698, %v801
      %v803 = vpop.f32.mrb[0].mxu0
      %804 = vmatprep.mubr.f32.mxu0 0.0
      %805 = vmatmul.mubr.f32.gmra.mrb[0].mxu0 %v653
      %v806 = vpop.f32.mrb[0].mxu0
      %v807 = vadd.f32 %v698, %v806
      %v808 = vpop.f32.mrb[0].mxu0
      %809 = vmatprep.mubr.f32.mxu0 0.0
      %810 = vmatmul.mubr.f32.gmra.mrb[0].mxu0 %v654
      %v811 = vpop.f32.mrb[0].mxu0
      %v812 = vadd.f32 %v698, %v811
      %v813 = vpop.f32.mrb[0].mxu0
      %814 = vmatprep.mubr.f32.mxu0 0.0
      %815 = vmatmul.mubr.f32.gmra.mrb[0].mxu0 %v655
      %v816 = vpop.f32.mrb[0].mxu0
      %v817 = vadd.f32 %v698, %v816
      %v818 = vpop.f32.mrb[0].mxu0
      %819 = vmatprep.mubr.f32.mxu0 0.0
      %820 = vmatmul.mubr.f32.gmra.mrb[0].mxu0 %v656
      %v821 = vpop.f32.mrb[0].mxu0
      %v822 = vadd.f32 %v698, %v821
      %v823 = vpop.f32.mrb[0].mxu0
      %824 = vmatprep.mubr.f32.mxu0 0.0
      %825 = vmatmul.mubr.f32.gmra.mrb[0].mxu0 %v657
      %v826 = vpop.f32.mrb[0].mxu0
      %v827 = vadd.f32 %v698, %v826
      %v828 = vpop.f32.mrb[0].mxu0
      %829 = vmatprep.mubr.f32.mxu0 0.0
      %830 = vmatmul.mubr.f32.gmra.mrb[0].mxu0 %v658
      %v831 = vpop.f32.mrb[0].mxu0
      %v832 = vadd.f32 %v698, %v831
      %v833 = vpop.f32.mrb[0].mxu0
      %834 = vmatprep.mubr.f32.mxu0 0.0
      %835 = vmatmul.mubr.f32.gmra.mrb[0].mxu0 %v659
      %v836 = vpop.f32.mrb[0].mxu0
      %v837 = vadd.f32 %v698, %v836
      %v838 = vpop.f32.mrb[0].mxu0
      %839 = vmatprep.mubr.f32.mxu0 0.0
      %840 = vmatmul.mubr.f32.gmra.mrb[0].mxu0 %v660
      %v841 = vpop.f32.mrb[0].mxu0
      %v842 = vadd.f32 %v698, %v841
      %v843 = vpop.f32.mrb[0].mxu0
      %844 = vmatprep.mubr.f32.mxu0 0.0
      %845 = vmatmul.mubr.f32.gmra.mrb[0].mxu0 %v661
      %v846 = vpop.f32.mrb[0].mxu0
      %v847 = vadd.f32 %v698, %v846
      %v848 = vpop.f32.mrb[0].mxu0
      %849 = vmatprep.mubr.f32.mxu0 0.0
      %850 = vmatmul.mubr.f32.gmra.mrb[0].mxu0 %v662
      %v851 = vpop.f32.mrb[0].mxu0
      %v852 = vadd.f32 %v698, %v851
      %v853 = vpop.f32.mrb[0].mxu0
      %854 = vmatprep.mubr.f32.mxu0 0.0
      %855 = vmatmul.mubr.f32.gmra.mrb[0].mxu0 %v663
      %v856 = vpop.f32.mrb[0].mxu0
      %v857 = vadd.f32 %v698, %v856
      %v858 = vpop.f32.mrb[0].mxu0
      %859 = vmatprep.mubr.f32.mxu0 0.0
      %860 = vmatmul.mubr.f32.gmra.mrb[0].mxu0 %v664
      %v861 = vpop.f32.mrb[0].mxu0
      %v862 = vadd.f32 %v698, %v861
      %v863 = vpop.f32.mrb[0].mxu0
      %864 = vmatprep.mubr.f32.mxu0 0.0
      %865 = vmatmul.mubr.f32.gmra.mrb[0].mxu0 %v665
      %v866 = vpop.f32.mrb[0].mxu0
      %v867 = vadd.f32 %v698, %v866
      %v868 = vpop.f32.mrb[0].mxu0
      %869 = vmatprep.mubr.f32.mxu0 0.0
      %870 = vmatmul.mubr.f32.gmra.mrb[0].mxu0 %v666
      %v871 = vpop.f32.mrb[0].mxu0
      %v872 = vadd.f32 %v698, %v871
      %v873 = vpop.f32.mrb[0].mxu0
      %874 = vmatprep.mubr.f32.mxu0 0.0
      %875 = vmatmul.mubr.f32.gmra.mrb[0].mxu0 %v667
      %v876 = vpop.f32.mrb[0].mxu0
      %v877 = vadd.f32 %v698, %v876
      %v878 = vpop.f32.mrb[0].mxu0
      %879 = vmatprep.mubr.f32.mxu0 0.0
      %880 = vmatmul.mubr.f32.gmra.mrb[0].mxu0 %v668
      %v881 = vpop.f32.mrb[0].mxu0
      %v882 = vadd.f32 %v698, %v881
      %v883 = vpop.f32.mrb[0].mxu0
      %884 = vmatprep.mubr.f32.mxu0 0.0
      %885 = vmatmul.mubr.f32.gmra.mrb[0].mxu0 %v669
      %v886 = vpop.f32.mrb[0].mxu0
      %v887 = vadd.f32 %v698, %v886
      %v888 = vpop.f32.mrb[0].mxu0
      %889 = vmatprep.mubr.f32.mxu0 0.0
      %890 = vmatmul.mubr.f32.gmra.mrb[0].mxu0 %v670
      %v891 = vpop.f32.mrb[0].mxu0
      %v892 = vadd.f32 %v698, %v891
      %v893 = vpop.f32.mrb[0].mxu0
      %894 = vmatprep.mubr.f32.mxu0 0.0
      %895 = vmatmul.mubr.f32.gmra.mrb[0].mxu0 %v671
      %v896 = vpop.f32.mrb[0].mxu0
      %v897 = vadd.f32 %v698, %v896
      %v898 = vpop.f32.mrb[0].mxu0
      %899 = vmatprep.mubr.f32.mxu0 0.0
      %900 = vmatmul.mubr.f32.gmra.mrb[0].mxu0 %v672
      %v901 = vpop.f32.mrb[0].mxu0
      %v902 = vadd.f32 %v698, %v901
      %v903 = vpop.f32.mrb[0].mxu0
      %904 = vmatprep.mubr.f32.mxu0 0.0
      %905 = vmatmul.mubr.f32.gmra.mrb[0].mxu0 %v673
      %v906 = vpop.f32.mrb[0].mxu0
      %v907 = vadd.f32 %v698, %v906
      %v908 = vpop.f32.mrb[0].mxu0
      %909 = vmatprep.mubr.f32.mxu0 0.0
      %910 = vmatmul.mubr.f32.gmra.mrb[0].mxu0 %v674
      %v911 = vpop.f32.mrb[0].mxu0
      %v912 = vadd.f32 %v698, %v911
      %v913 = vpop.f32.mrb[0].mxu0
      %914 = vmatprep.mubr.f32.mxu0 0.0
      %915 = vmatmul.mubr.f32.gmra.mrb[0].mxu0 %v675
      %v916 = vpop.f32.mrb[0].mxu0
      %v917 = vadd.f32 %v698, %v916
      %v918 = vpop.f32.mrb[0].mxu0
      %919 = vmatprep.mubr.f32.mxu0 0.0
      %920 = vmatmul.mubr.f32.gmra.mrb[0].mxu0 %v676
      %v921 = vpop.f32.mrb[0].mxu0
      %v922 = vadd.f32 %v698, %v921
      %v923 = vpop.f32.mrb[0].mxu0
      %924 = vdwg.mxu0
      %v925 = vmax.f32 %v767, 0.0
      %v926 = vmax.f32 %v772, 0.0
      %v927 = vmax.f32 %v777, 0.0
      %v928 = vmax.f32 %v782, 0.0
      %v929 = vmax.f32 %v787, 0.0
      %v930 = vmax.f32 %v792, 0.0
      %v931 = vmax.f32 %v797, 0.0
      %v932 = vmax.f32 %v802, 0.0
      %v933 = vmax.f32 %v807, 0.0
      %v934 = vmax.f32 %v812, 0.0
      %v935 = vmax.f32 %v817, 0.0
      %v936 = vmax.f32 %v822, 0.0
      %v937 = vmax.f32 %v827, 0.0
      %v938 = vmax.f32 %v832, 0.0
      %v939 = vmax.f32 %v837, 0.0
      %v940 = vmax.f32 %v842, 0.0
      %v941 = vmax.f32 %v847, 0.0
      %v942 = vmax.f32 %v852, 0.0
      %v943 = vmax.f32 %v857, 0.0
      %v944 = vmax.f32 %v862, 0.0
      %v945 = vmax.f32 %v867, 0.0
      %v946 = vmax.f32 %v872, 0.0
      %v947 = vmax.f32 %v877, 0.0
      %v948 = vmax.f32 %v882, 0.0
      %v949 = vmax.f32 %v887, 0.0
      %v950 = vmax.f32 %v892, 0.0
      %v951 = vmax.f32 %v897, 0.0
      %v952 = vmax.f32 %v902, 0.0
      %v953 = vmax.f32 %v907, 0.0
      %v954 = vmax.f32 %v912, 0.0
      %v955 = vmax.f32 %v917, 0.0
      %v956 = vmax.f32 %v922, 0.0
      %v957 = vld [vmem:[%s5] sm:$0xff]
      %v958 = vld [vmem:[%s5 + $0x8] sm:$0xff]
      %v959 = vld [vmem:[%s5 + $0x10] sm:$0xff]
      %v960 = vld [vmem:[%s5 + $0x18] sm:$0xff]
      %v961 = vld [vmem:[%s5 + $0x20] sm:$0xff]
      %v962 = vld [vmem:[%s5 + $0x28] sm:$0xff]
      %v963 = vld [vmem:[%s5 + $0x30] sm:$0xff]
      %v964 = vld [vmem:[%s5 + $0x38] sm:$0xff]
      %v965 = vld [vmem:[%s5 + $0x40] sm:$0xff]
      %v966 = vld [vmem:[%s5 + $0x48] sm:$0xff]
      %v967 = vld [vmem:[%s5 + $0x50] sm:$0xff]
      %v968 = vld [vmem:[%s5 + $0x58] sm:$0xff]
      %v969 = vld [vmem:[%s5 + $0x60] sm:$0xff]
      %v970 = vld [vmem:[%s5 + $0x68] sm:$0xff]
      %v971 = vld [vmem:[%s5 + $0x70] sm:$0xff]
      %v972 = vld [vmem:[%s5 + $0x78] sm:$0xff]
      %v973 = vld [vmem:[%s6] sm:$0x1]
      %v975 = vlaneseq
      %v976 = vshrl.u32 %v975, 7
      %v977 = vsub.s32 0, %v976
      %v978 = vrot.slane %v973, %v977
      %980 = vmatprep.subr.mxu0 0.0
      %981 = vmatpush1.msra.mxu0 %v957
      %982 = vmatprep.subr.mxu0 0.0
      %983 = vmatpush1.msra.mxu0 %v958
      %984 = vmatprep.subr.mxu0 0.0
      %985 = vmatpush1.msra.mxu0 %v959
      %986 = vmatprep.subr.mxu0 0.0
      %987 = vmatpush1.msra.mxu0 %v960
      %988 = vmatprep.subr.mxu0 0.0
      %989 = vmatpush1.msra.mxu0 %v961
      %990 = vmatprep.subr.mxu0 0.0
      %991 = vmatpush1.msra.mxu0 %v962
      %992 = vmatprep.subr.mxu0 0.0
      %993 = vmatpush1.msra.mxu0 %v963
      %994 = vmatprep.subr.mxu0 0.0
      %995 = vmatpush1.msra.mxu0 %v964
      %996 = vmatprep.subr.mxu0 0.0
      %997 = vmatpush1.msra.mxu0 %v965
      %998 = vmatprep.subr.mxu0 0.0
      %999 = vmatpush1.msra.mxu0 %v966
      %1000 = vmatprep.subr.mxu0 0.0
      %1001 = vmatpush1.msra.mxu0 %v967
      %1002 = vmatprep.subr.mxu0 0.0
      %1003 = vmatpush1.msra.mxu0 %v968
      %1004 = vmatprep.subr.mxu0 0.0
      %1005 = vmatpush1.msra.mxu0 %v969
      %1006 = vmatprep.subr.mxu0 0.0
      %1007 = vmatpush1.msra.mxu0 %v970
      %1008 = vmatprep.subr.mxu0 0.0
      %1009 = vmatpush1.msra.mxu0 %v971
      %1010 = vmatprep.subr.mxu0 0.0
      %1011 = vmatpush1.msra.mxu0 %v972
      %1012 = vmatprep.subr.mxu0 0.0
      %1013 = vmatpush1.msra.mxu0 0.0
      %1014 = vmatprep.subr.mxu0 0.0
      %1015 = vmatpush1.msra.mxu0 0.0
      %1016 = vmatprep.subr.mxu0 0.0
      %1017 = vmatpush1.msra.mxu0 0.0
      %1018 = vmatprep.subr.mxu0 0.0
      %1019 = vmatpush1.msra.mxu0 0.0
      %1020 = vmatprep.subr.mxu0 0.0
      %1021 = vmatpush1.msra.mxu0 0.0
      %1022 = vmatprep.subr.mxu0 0.0
      %1023 = vmatpush1.msra.mxu0 0.0
      %1024 = vmatprep.subr.mxu0 0.0
      %1025 = vmatpush1.msra.mxu0 0.0
      %1026 = vmatprep.subr.mxu0 0.0
      %1027 = vmatpush1.msra.mxu0 0.0
      %1028 = vmatprep.subr.mxu0 0.0
      %1029 = vmatpush1.msra.mxu0 0.0
      %1030 = vmatprep.subr.mxu0 0.0
      %1031 = vmatpush1.msra.mxu0 0.0
      %1032 = vmatprep.subr.mxu0 0.0
      %1033 = vmatpush1.msra.mxu0 0.0
      %1034 = vmatprep.subr.mxu0 0.0
      %1035 = vmatpush1.msra.mxu0 0.0
      %1036 = vmatprep.subr.mxu0 0.0
      %1037 = vmatpush1.msra.mxu0 0.0
      %1038 = vmatprep.subr.mxu0 0.0
      %1039 = vmatpush1.msra.mxu0 0.0
      %1040 = vmatprep.subr.mxu0 0.0
      %1041 = vmatpush1.msra.mxu0 0.0
      %1042 = vmatprep.subr.mxu0 0.0
      %1043 = vmatpush1.msra.mxu0 0.0
      %1044 = vmatprep.mubr.f32.mxu0 0.0
      %1045 = vmatmul.mubr.f32.gmra.mrb[0].mxu0 %v925
      %v1046 = vpop.f32.mrb[0].mxu0
      %v1047 = vadd.f32 %v978, %v1046
      %v1048 = vpop.f32.mrb[0].mxu0
      %1049 = vmatprep.mubr.f32.mxu0 0.0
      %1050 = vmatmul.mubr.f32.gmra.mrb[0].mxu0 %v926
      %v1051 = vpop.f32.mrb[0].mxu0
      %v1052 = vadd.f32 %v978, %v1051
      %v1053 = vpop.f32.mrb[0].mxu0
      %1054 = vmatprep.mubr.f32.mxu0 0.0
      %1055 = vmatmul.mubr.f32.gmra.mrb[0].mxu0 %v927
      %v1056 = vpop.f32.mrb[0].mxu0
      %v1057 = vadd.f32 %v978, %v1056
      %v1058 = vpop.f32.mrb[0].mxu0
      %1059 = vmatprep.mubr.f32.mxu0 0.0
      %1060 = vmatmul.mubr.f32.gmra.mrb[0].mxu0 %v928
      %v1061 = vpop.f32.mrb[0].mxu0
      %v1062 = vadd.f32 %v978, %v1061
      %v1063 = vpop.f32.mrb[0].mxu0
      %1064 = vmatprep.mubr.f32.mxu0 0.0
      %1065 = vmatmul.mubr.f32.gmra.mrb[0].mxu0 %v929
      %v1066 = vpop.f32.mrb[0].mxu0
      %v1067 = vadd.f32 %v978, %v1066
      %v1068 = vpop.f32.mrb[0].mxu0
      %1069 = vmatprep.mubr.f32.mxu0 0.0
      %1070 = vmatmul.mubr.f32.gmra.mrb[0].mxu0 %v930
      %v1071 = vpop.f32.mrb[0].mxu0
      %v1072 = vadd.f32 %v978, %v1071
      %v1073 = vpop.f32.mrb[0].mxu0
      %1074 = vmatprep.mubr.f32.mxu0 0.0
      %1075 = vmatmul.mubr.f32.gmra.mrb[0].mxu0 %v931
      %v1076 = vpop.f32.mrb[0].mxu0
      %v1077 = vadd.f32 %v978, %v1076
      %v1078 = vpop.f32.mrb[0].mxu0
      %1079 = vmatprep.mubr.f32.mxu0 0.0
      %1080 = vmatmul.mubr.f32.gmra.mrb[0].mxu0 %v932
      %v1081 = vpop.f32.mrb[0].mxu0
      %v1082 = vadd.f32 %v978, %v1081
      %v1083 = vpop.f32.mrb[0].mxu0
      %1084 = vmatprep.mubr.f32.mxu0 0.0
      %1085 = vmatmul.mubr.f32.gmra.mrb[0].mxu0 %v933
      %v1086 = vpop.f32.mrb[0].mxu0
      %v1087 = vadd.f32 %v978, %v1086
      %v1088 = vpop.f32.mrb[0].mxu0
      %1089 = vmatprep.mubr.f32.mxu0 0.0
      %1090 = vmatmul.mubr.f32.gmra.mrb[0].mxu0 %v934
      %v1091 = vpop.f32.mrb[0].mxu0
      %v1092 = vadd.f32 %v978, %v1091
      %v1093 = vpop.f32.mrb[0].mxu0
      %1094 = vmatprep.mubr.f32.mxu0 0.0
      %1095 = vmatmul.mubr.f32.gmra.mrb[0].mxu0 %v935
      %v1096 = vpop.f32.mrb[0].mxu0
      %v1097 = vadd.f32 %v978, %v1096
      %v1098 = vpop.f32.mrb[0].mxu0
      %1099 = vmatprep.mubr.f32.mxu0 0.0
      %1100 = vmatmul.mubr.f32.gmra.mrb[0].mxu0 %v936
      %v1101 = vpop.f32.mrb[0].mxu0
      %v1102 = vadd.f32 %v978, %v1101
      %v1103 = vpop.f32.mrb[0].mxu0
      %1104 = vmatprep.mubr.f32.mxu0 0.0
      %1105 = vmatmul.mubr.f32.gmra.mrb[0].mxu0 %v937
      %v1106 = vpop.f32.mrb[0].mxu0
      %v1107 = vadd.f32 %v978, %v1106
      %v1108 = vpop.f32.mrb[0].mxu0
      %1109 = vmatprep.mubr.f32.mxu0 0.0
      %1110 = vmatmul.mubr.f32.gmra.mrb[0].mxu0 %v938
      %v1111 = vpop.f32.mrb[0].mxu0
      %v1112 = vadd.f32 %v978, %v1111
      %v1113 = vpop.f32.mrb[0].mxu0
      %1114 = vmatprep.mubr.f32.mxu0 0.0
      %1115 = vmatmul.mubr.f32.gmra.mrb[0].mxu0 %v939
      %v1116 = vpop.f32.mrb[0].mxu0
      %v1117 = vadd.f32 %v978, %v1116
      %v1118 = vpop.f32.mrb[0].mxu0
      %1119 = vmatprep.mubr.f32.mxu0 0.0
      %1120 = vmatmul.mubr.f32.gmra.mrb[0].mxu0 %v940
      %v1121 = vpop.f32.mrb[0].mxu0
      %v1122 = vadd.f32 %v978, %v1121
      %v1123 = vpop.f32.mrb[0].mxu0
      %1124 = vmatprep.mubr.f32.mxu0 0.0
      %1125 = vmatmul.mubr.f32.gmra.mrb[0].mxu0 %v941
      %v1126 = vpop.f32.mrb[0].mxu0
      %v1127 = vadd.f32 %v978, %v1126
      %v1128 = vpop.f32.mrb[0].mxu0
      %1129 = vmatprep.mubr.f32.mxu0 0.0
      %1130 = vmatmul.mubr.f32.gmra.mrb[0].mxu0 %v942
      %v1131 = vpop.f32.mrb[0].mxu0
      %v1132 = vadd.f32 %v978, %v1131
      %v1133 = vpop.f32.mrb[0].mxu0
      %1134 = vmatprep.mubr.f32.mxu0 0.0
      %1135 = vmatmul.mubr.f32.gmra.mrb[0].mxu0 %v943
      %v1136 = vpop.f32.mrb[0].mxu0
      %v1137 = vadd.f32 %v978, %v1136
      %v1138 = vpop.f32.mrb[0].mxu0
      %1139 = vmatprep.mubr.f32.mxu0 0.0
      %1140 = vmatmul.mubr.f32.gmra.mrb[0].mxu0 %v944
      %v1141 = vpop.f32.mrb[0].mxu0
      %v1142 = vadd.f32 %v978, %v1141
      %v1143 = vpop.f32.mrb[0].mxu0
      %1144 = vmatprep.mubr.f32.mxu0 0.0
      %1145 = vmatmul.mubr.f32.gmra.mrb[0].mxu0 %v945
      %v1146 = vpop.f32.mrb[0].mxu0
      %v1147 = vadd.f32 %v978, %v1146
      %v1148 = vpop.f32.mrb[0].mxu0
      %1149 = vmatprep.mubr.f32.mxu0 0.0
      %1150 = vmatmul.mubr.f32.gmra.mrb[0].mxu0 %v946
      %v1151 = vpop.f32.mrb[0].mxu0
      %v1152 = vadd.f32 %v978, %v1151
      %v1153 = vpop.f32.mrb[0].mxu0
      %1154 = vmatprep.mubr.f32.mxu0 0.0
      %1155 = vmatmul.mubr.f32.gmra.mrb[0].mxu0 %v947
      %v1156 = vpop.f32.mrb[0].mxu0
      %v1157 = vadd.f32 %v978, %v1156
      %v1158 = vpop.f32.mrb[0].mxu0
      %1159 = vmatprep.mubr.f32.mxu0 0.0
      %1160 = vmatmul.mubr.f32.gmra.mrb[0].mxu0 %v948
      %v1161 = vpop.f32.mrb[0].mxu0
      %v1162 = vadd.f32 %v978, %v1161
      %v1163 = vpop.f32.mrb[0].mxu0
      %1164 = vmatprep.mubr.f32.mxu0 0.0
      %1165 = vmatmul.mubr.f32.gmra.mrb[0].mxu0 %v949
      %v1166 = vpop.f32.mrb[0].mxu0
      %v1167 = vadd.f32 %v978, %v1166
      %v1168 = vpop.f32.mrb[0].mxu0
      %1169 = vmatprep.mubr.f32.mxu0 0.0
      %1170 = vmatmul.mubr.f32.gmra.mrb[0].mxu0 %v950
      %v1171 = vpop.f32.mrb[0].mxu0
      %v1172 = vadd.f32 %v978, %v1171
      %v1173 = vpop.f32.mrb[0].mxu0
      %1174 = vmatprep.mubr.f32.mxu0 0.0
      %1175 = vmatmul.mubr.f32.gmra.mrb[0].mxu0 %v951
      %v1176 = vpop.f32.mrb[0].mxu0
      %v1177 = vadd.f32 %v978, %v1176
      %v1178 = vpop.f32.mrb[0].mxu0
      %1179 = vmatprep.mubr.f32.mxu0 0.0
      %1180 = vmatmul.mubr.f32.gmra.mrb[0].mxu0 %v952
      %v1181 = vpop.f32.mrb[0].mxu0
      %v1182 = vadd.f32 %v978, %v1181
      %v1183 = vpop.f32.mrb[0].mxu0
      %1184 = vmatprep.mubr.f32.mxu0 0.0
      %1185 = vmatmul.mubr.f32.gmra.mrb[0].mxu0 %v953
      %v1186 = vpop.f32.mrb[0].mxu0
      %v1187 = vadd.f32 %v978, %v1186
      %v1188 = vpop.f32.mrb[0].mxu0
      %1189 = vmatprep.mubr.f32.mxu0 0.0
      %1190 = vmatmul.mubr.f32.gmra.mrb[0].mxu0 %v954
      %v1191 = vpop.f32.mrb[0].mxu0
      %v1192 = vadd.f32 %v978, %v1191
      %v1193 = vpop.f32.mrb[0].mxu0
      %1194 = vmatprep.mubr.f32.mxu0 0.0
      %1195 = vmatmul.mubr.f32.gmra.mrb[0].mxu0 %v955
      %v1196 = vpop.f32.mrb[0].mxu0
      %v1197 = vadd.f32 %v978, %v1196
      %v1198 = vpop.f32.mrb[0].mxu0
      %1199 = vmatprep.mubr.f32.mxu0 0.0
      %1200 = vmatmul.mubr.f32.gmra.mrb[0].mxu0 %v956
      %v1201 = vpop.f32.mrb[0].mxu0
      %v1202 = vadd.f32 %v978, %v1201
      %v1203 = vpop.f32.mrb[0].mxu0
      %1204 = vdwg.mxu0
      %1205 = vst [vmem:[%s280] sm:$0xff] %v1047
      %1206 = vst [vmem:[%s280 + $0x8] sm:$0xff] %v1052
      %1207 = vst [vmem:[%s280 + $0x10] sm:$0xff] %v1057
      %1208 = vst [vmem:[%s280 + $0x18] sm:$0xff] %v1062
      %1209 = vst [vmem:[%s280 + $0x20] sm:$0xff] %v1067
      %1210 = vst [vmem:[%s280 + $0x28] sm:$0xff] %v1072
      %1211 = vst [vmem:[%s280 + $0x30] sm:$0xff] %v1077
      %1212 = vst [vmem:[%s280 + $0x38] sm:$0xff] %v1082
      %1213 = vst [vmem:[%s280 + $0x40] sm:$0xff] %v1087
      %1214 = vst [vmem:[%s280 + $0x48] sm:$0xff] %v1092
      %1215 = vst [vmem:[%s280 + $0x50] sm:$0xff] %v1097
      %1216 = vst [vmem:[%s280 + $0x58] sm:$0xff] %v1102
      %1217 = vst [vmem:[%s280 + $0x60] sm:$0xff] %v1107
      %1218 = vst [vmem:[%s280 + $0x68] sm:$0xff] %v1112
      %1219 = vst [vmem:[%s280 + $0x70] sm:$0xff] %v1117
      %1220 = vst [vmem:[%s280 + $0x78] sm:$0xff] %v1122
      %1221 = vst [vmem:[%s280 + $0x80] sm:$0xff] %v1127
      %1222 = vst [vmem:[%s280 + $0x88] sm:$0xff] %v1132
      %1223 = vst [vmem:[%s280 + $0x90] sm:$0xff] %v1137
      %1224 = vst [vmem:[%s280 + $0x98] sm:$0xff] %v1142
      %1225 = vst [vmem:[%s280 + $0xa0] sm:$0xff] %v1147
      %1226 = vst [vmem:[%s280 + $0xa8] sm:$0xff] %v1152
      %1227 = vst [vmem:[%s280 + $0xb0] sm:$0xff] %v1157
      %1228 = vst [vmem:[%s280 + $0xb8] sm:$0xff] %v1162
      %1229 = vst [vmem:[%s280 + $0xc0] sm:$0xff] %v1167
      %1230 = vst [vmem:[%s280 + $0xc8] sm:$0xff] %v1172
      %1231 = vst [vmem:[%s280 + $0xd0] sm:$0xff] %v1177
      %1232 = vst [vmem:[%s280 + $0xd8] sm:$0xff] %v1182
      %1233 = vst [vmem:[%s280 + $0xe0] sm:$0xff] %v1187
      %1234 = vst [vmem:[%s280 + $0xe8] sm:$0xff] %v1192
      %1235 = vst [vmem:[%s280 + $0xf0] sm:$0xff] %v1197
      %1236 = vst [vmem:[%s280 + $0xf8] sm:$0xff] %v1202
      %s1237 = smul.u32 32, %s18
      %p1238 = scmp.lt.s32.totalorder %s1237, 63
      %s1239 = scalar_select %p1238, %s1237, 63
      %s1240 = smul.addr %s1239, 8
      %s1241 = scalar_lea.vmem %s7, %s1240
      // Predicated region
      $region49: #{three_layer_network.1} parent=47 // pred_check
        %p1242 = pneg %p188
      $region50: #{three_layer_network.1} parent=47 // pred_check_branch
        %1244 = sbr.rel (%p1242) target = $region52
      $region51: #{three_layer_network.1} parent=47 // pred_region
        %s1245 = smul.u32 32, %s18
      $region52: #{three_layer_network.1} parent=47 // pred_fallthru
        _
    $region48: #{three_layer_network.1} parent=5 // pred_fallthru
      _
    %p1246 = scmp.le.s32.totalorder 2, %s13
    // Predicated region
    $region53: #{three_layer_network.1} parent=5 // pred_check
      %p1247 = pneg %p1246
    $region54: #{three_layer_network.1} parent=5 // pred_check_branch
      %1249 = sbr.rel (%p1247) target = $region56
    $region55: #{three_layer_network.1} parent=5 // pred_region
      %s1250 = ssub.s32 %s13, 2
      // Predicated region
      $region57: #{three_layer_network.1} parent=55 // pred_check
        %p1251 = pneg %p194
      $region58: #{three_layer_network.1} parent=55 // pred_check_branch
        %1253 = sbr.rel (%p1251) target = $region60
      $region59: #{three_layer_network.1} parent=55 // pred_region
        %s1254 = smul.u32 32, %s19
        %p1255 = scmp.lt.s32.totalorder %s1254, 63
        %s1256 = scalar_select %p1255, %s1254, 63
        %s1257 = smul.addr %s1256, 8
        %s1258 = scalar_lea.vmem %s7, %s1257
      $region60: #{three_layer_network.1} parent=55 // pred_fallthru
        _
    $region56: #{three_layer_network.1} parent=5 // pred_fallthru
      _
  $region6: #{three_layer_network.1} parent=0 // loop_footer
    %s17 = sadd.s32 1, %s13
  $region7: #{three_layer_network.1} parent=0 // loop_footer_branch
    %12 = sbr.rel target = $region3
  $region8: #{three_layer_network.1} parent=0 // loop_exit
    _

</llo_original>
